<compile_context>
chip_gen: v5e
topology: v5e:2x2
jax: 0.10.0
libtpu: 0.0.40
codegen_flags: <defaults>
</compile_context>

<pallas_src>
import jax
import jax.numpy as jnp
from jax.experimental import pallas as pl
from jax.experimental.pallas import tpu as pltpu


def _sconv_fused_kernel(x_ref, w_ref, b_ref, o_ref):
    # x_ref: (B, C_in*L_in)            flattened input batch
    # w_ref: (C_in*L_in, C_out*L_out)  fused conv+linear weight
    # b_ref: (1, C_out*L_out)          fused bias
    # o_ref: (B, C_out*L_out)
    z = jnp.dot(x_ref[...], w_ref[...], preferred_element_type=jnp.float32)
    z = z + b_ref[...]
    # LeakyReLU (PyTorch default negative_slope = 0.01).
    o_ref[...] = jnp.where(z > 0, z, 0.01 * z).astype(o_ref.dtype)


def _fold_params(wconv, bconv, wdown, bdown):
    """Fold Conv1d(k=3, pad=1) followed by Linear(L_in -> L_out) into one GEMM."""
    C_out, C_in, K = wconv.shape
    L_out, L_in = wdown.shape
    assert K == 3, "folding below assumes kernel_size=3, padding=1"
    # shifted[k][m, l] = wdown[m, l - k + 1], out-of-range -> 0.
    shifted = jnp.stack(
        [
            jnp.pad(wdown[:, 1:], ((0, 0), (0, 1))),   # k = 0 -> wdown[m, l+1]
            wdown,                                      # k = 1 -> wdown[m, l]
            jnp.pad(wdown[:, :-1], ((0, 0), (1, 0))),   # k = 2 -> wdown[m, l-1]
        ],
        axis=0,
    )                                                   # (3, L_out, L_in)
    # Weff[c, l, o, m] = sum_k wconv[o, c, k] * shifted[k, m, l]
    weff = jnp.einsum("ock,kml->clom", wconv, shifted)
    weff = weff.reshape(C_in * L_in, C_out * L_out).astype(jnp.float32)
    # Beff[o, m] = bdown[m] + bconv[o] * sum_l wdown[m, l]
    beff = bdown[None, :] + bconv[:, None] * wdown.sum(axis=1)[None, :]
    beff = beff.reshape(1, C_out * L_out).astype(jnp.float32)
    return weff, beff


@jax.jit
def sconv_block(x, wconv, bconv, wdown, bdown):
    """x: (B, C_in, L_in) f32. wconv: (C_out, C_in, 3). bconv: (C_out,).
    wdown: (L_out, L_in). bdown: (L_out,). Returns (B, C_out, L_out)."""
    B, C_in, L_in = x.shape
    C_out = wconv.shape[0]
    L_out = wdown.shape[0]

    weff, beff = _fold_params(wconv, bconv, wdown, bdown)
    x_flat = x.reshape(B, C_in * L_in)                  # contiguous reshape

    out_flat = pl.pallas_call(
        _sconv_fused_kernel,
        out_shape=jax.ShapeDtypeStruct((B, C_out * L_out), x.dtype),
        # Gridless: one kernel invocation, all operands fully resident in VMEM.
        in_specs=[
            pl.BlockSpec(memory_space=pltpu.MemorySpace.VMEM),
            pl.BlockSpec(memory_space=pltpu.MemorySpace.VMEM),
            pl.BlockSpec(memory_space=pltpu.MemorySpace.VMEM),
        ],
        out_specs=pl.BlockSpec(memory_space=pltpu.MemorySpace.VMEM),
    )(x_flat, weff, beff)

    return out_flat.reshape(B, C_out, L_out)


def _reference(x, wconv, bconv, wdown, bdown):
    # Pure-JAX reference of the same forward pass (conv -> linear -> leaky relu).
    B, C_in, L_in = x.shape
    C_out = wconv.shape[0]
    xp = jnp.pad(x, ((0, 0), (0, 0), (1, 1)))
    y = jnp.zeros((B, C_out, L_in), jnp.float32) + bconv[None, :, None]
    for k in range(3):
        y = y + jnp.einsum("oc,bcl->bol", wconv[:, :, k], xp[:, :, k:k + L_in])
    z = jnp.einsum("bol,ml->bom", y, wdown) + bdown[None, None, :]
    return jnp.where(z > 0, z, 0.01 * z)


if __name__ == "__main__":
    # Module config: vs = (L_in, L_out) = (16, 8), fs = (C_in, C_out) = (4, 8)
    B, C_in, C_out, L_in, L_out = 2, 4, 8, 16, 8

    key = jax.random.PRNGKey(0)
    kx, kw, kb, kwd, kbd = jax.random.split(key, 5)
    x = jax.random.normal(kx, (B, C_in, L_in), jnp.float32)
    wconv = jax.random.normal(kw, (C_out, C_in, 3), jnp.float32) * 0.1
    bconv = jax.random.normal(kb, (C_out,), jnp.float32) * 0.1
    wdown = jax.random.normal(kwd, (L_out, L_in), jnp.float32) * 0.1
    bdown = jax.random.normal(kbd, (L_out,), jnp.float32) * 0.1

    out = sconv_block(x, wconv, bconv, wdown, bdown)
    out = jax.block_until_ready(out)

    ref = _reference(x, wconv, bconv, wdown, bdown)
    assert out.shape == (B, C_out, L_out)
    assert jnp.allclose(out, ref, atol=1e-4, rtol=1e-4)

    print("KERNEL_OK")
</pallas_src>

<mosaic_0001>
module attributes {stable_mosaic.version = 11 : i64} {
  func.func @_sconv_fused_kernel(%arg0: memref<2x64xf32, #tpu.memory_space<vmem>>, %arg1: memref<64x64xf32, #tpu.memory_space<vmem>>, %arg2: memref<1x64xf32, #tpu.memory_space<vmem>>, %arg3: memref<2x64xf32, #tpu.memory_space<vmem>>) attributes {dimension_semantics = [], scalar_prefetch = 0 : i64, scratch_operands = 0 : i64, tpu.core_type = #tpu.core_type<tc>} {
    %c0 = arith.constant 0 : index
    %c0_0 = arith.constant 0 : index
    %0 = vector.load %arg0[%c0, %c0_0] : memref<2x64xf32, #tpu.memory_space<vmem>>, vector<2x64xf32>
    %c0_1 = arith.constant 0 : index
    %c0_2 = arith.constant 0 : index
    %1 = vector.load %arg1[%c0_1, %c0_2] : memref<64x64xf32, #tpu.memory_space<vmem>>, vector<64x64xf32>
    %cst = arith.constant dense<0.000000e+00> : vector<2x64xf32>
    %2 = tpu.matmul %0, %1, %cst {dimension_numbers = #tpu.dot_dimension_numbers<[1], [0], [0], [1], [0, 0, 1, 1], [], []>} : vector<2x64xf32>, vector<64x64xf32>, vector<2x64xf32> -> vector<2x64xf32>
    %c0_3 = arith.constant 0 : index
    %c0_4 = arith.constant 0 : index
    %3 = vector.load %arg2[%c0_3, %c0_4] : memref<1x64xf32, #tpu.memory_space<vmem>>, vector<1x64xf32>
    %4 = vector.broadcast %3 : vector<1x64xf32> to vector<2x64xf32>
    %5 = arith.addf %2, %4 : vector<2x64xf32>
    %cst_5 = arith.constant 0.000000e+00 : f32
    %6 = vector.broadcast %cst_5 : f32 to vector<2x64xf32>
    %7 = arith.cmpf ogt, %5, %6 : vector<2x64xf32>
    %cst_6 = arith.constant 0.00999999977 : f32
    %8 = vector.broadcast %cst_6 : f32 to vector<2x64xf32>
    %9 = arith.mulf %8, %5 : vector<2x64xf32>
    %10 = arith.select %7, %5, %9 : vector<2x64xi1>, vector<2x64xf32>
    %c0_7 = arith.constant 0 : index
    %c0_8 = arith.constant 0 : index
    %11 = vector.load %arg3[%c0_7, %c0_8] : memref<2x64xf32, #tpu.memory_space<vmem>>, vector<2x64xf32>
    tpu.vector_store %arg3[%c0_7, %c0_8], %10 {strides = array<i32>} : memref<2x64xf32, #tpu.memory_space<vmem>>, vector<2x64xf32>,
    return
  }
}

</mosaic_0001>

<llo_original>
// kernel: sconv_block.1
$region0: #{sconv_block.1}
  #allocation0 [shape = 'u32[]', space=smem, size = 0x4, offset = 0x4, fixed_abs, tag = 'smem constant byte address 0x4 - core index']
  #allocation1 [shape = 'u32[72,128]{1,0:T(1,128)}', space=vmem, size = 0x9000, scoped, tag = 'internal scratch']
  %s0 = inlined_call_operand.vmem [shape: f32[2,64], index: 0, kind: input, shape index: {}]
  %s1 = inlined_call_operand.vmem [shape: f32[64,64], index: 1, kind: input, shape index: {}]
  %s2 = inlined_call_operand.vmem [shape: f32[1,64], index: 2, kind: input, shape index: {}]
  %s3 = inlined_call_operand.vmem [shape: f32[2,64], index: 3, kind: output, shape index: {}]
  %s4 = sld [smem:[#allocation0]]
  $region22: #{sconv_block.1} parent=0
    _
  %s6 = ssub.s32 1, %s4
  %s7 = scalar_select 0, %s6, %s4
  // Predicated region
  $region2: #{sconv_block.1} parent=0 // pred_check
    _
  $region3: #{sconv_block.1} parent=0 // pred_check_branch
    %9 = sbr.rel (0) target = $region5
  $region4: #{sconv_block.1} parent=0 // pred_region
    _
  $region5: #{sconv_block.1} parent=0 // pred_fallthru
    _
  // Predicated region
  $region6: #{sconv_block.1} parent=0 // pred_check
    _
  $region7: #{sconv_block.1} parent=0 // pred_check_branch
    %11 = sbr.rel (0) target = $region9
  $region8: #{sconv_block.1} parent=0 // pred_region
    _
  $region9: #{sconv_block.1} parent=0 // pred_fallthru
    _
  // Predicated region
  $region10: #{sconv_block.1} parent=0 // pred_check
    _
  $region11: #{sconv_block.1} parent=0 // pred_check_branch
    %13 = sbr.rel (0) target = $region13
  $region12: #{sconv_block.1} parent=0 // pred_region
    _
  $region13: #{sconv_block.1} parent=0 // pred_fallthru
    _
  %v14 = vld [vmem:[%s0] sm:$0x3]
  %v15 = vld [vmem:[%s1] sm:$0xff]
  %v16 = vld [vmem:[%s1 + $0x8] sm:$0xff]
  %v17 = vld [vmem:[%s1 + $0x10] sm:$0xff]
  %v18 = vld [vmem:[%s1 + $0x18] sm:$0xff]
  %v19 = vld [vmem:[%s1 + $0x20] sm:$0xff]
  %v20 = vld [vmem:[%s1 + $0x28] sm:$0xff]
  %v21 = vld [vmem:[%s1 + $0x30] sm:$0xff]
  %v22 = vld [vmem:[%s1 + $0x38] sm:$0xff]
  %v23 = vld [vmem:[%s2] sm:$0x1]
  %v25 = vperm.slane %v23, 0
  %vm27 = vcmask 523264
  %v29 = vsel %vm27, %v14, 0
  %31 = vmatpush.msra.mxu0 0.0
  %32 = vmatpush.msra.mxu0 0.0
  %33 = vmatpush.msra.mxu0 0.0
  %34 = vmatpush.msra.mxu0 0.0
  %35 = vmatpush.msra.mxu0 0.0
  %36 = vmatpush.msra.mxu0 0.0
  %37 = vmatpush.msra.mxu0 0.0
  %38 = vmatpush.msra.mxu0 0.0
  %39 = vmatpush.msra.mxu0 %v22
  %40 = vmatpush.msra.mxu0 %v21
  %41 = vmatpush.msra.mxu0 %v20
  %42 = vmatpush.msra.mxu0 %v19
  %43 = vmatpush.msra.mxu0 %v18
  %44 = vmatpush.msra.mxu0 %v17
  %45 = vmatpush.msra.mxu0 %v16
  %46 = vmatpush.msra.mxu0 %v15
  %47 = vmatmul.f32.gmra.mxu0 %v29
  %v48 = vpop.f32.mrf.mxu0
  %v49 = vadd.f32 %v25, %v48
  %50 = vdwg.mxu0
  %vm51 = vcmp.gt.f32.partialorder %v49, 0.0
  %v52 = vmul.f32 %v49, 0.01
  %v53 = vsel %vm51, %v49, %v52
  %vm54 = vcmask 517120
  %55 = vst.msk [vmem:[%s3] sm:$0x3] %vm54, %v53
  // Predicated region
  $region14: #{sconv_block.1} parent=0 // pred_check
    _
  $region15: #{sconv_block.1} parent=0 // pred_check_branch
    %57 = sbr.rel (0) target = $region17
  $region16: #{sconv_block.1} parent=0 // pred_region
    _
  $region17: #{sconv_block.1} parent=0 // pred_fallthru
    _
  // Predicated region
  $region18: #{sconv_block.1} parent=0 // pred_check
    _
  $region19: #{sconv_block.1} parent=0 // pred_check_branch
    %59 = sbr.rel (0) target = $region21
  $region20: #{sconv_block.1} parent=0 // pred_region
    _
  $region21: #{sconv_block.1} parent=0 // pred_fallthru
    _

</llo_original>
